<compile_context>
chip_gen: v7x
topology: tpu7x:2x2x1
jax: 0.10.0
libtpu: 0.0.40
codegen_flags: <defaults>
</compile_context>

<pallas_src>
import functools

import jax
import jax.numpy as jnp
from jax import lax
from jax.experimental import pallas as pl
from jax.experimental.pallas import tpu as pltpu


def _round_up(x, m):
    return ((x + m - 1) // m) * m


def _cve_kernel(x_ref, p_ref, w2_ref, o_ref, *, max_value, eps, d_true, d_pad):
    # x_ref:  [TM, 1]   f32 token values
    # p_ref:  [8, Dp]   f32 packed params: row0=w1, row1=b1, row2=b2,
    #                   row3=gamma, row4=beta (rows 5..7 unused zeros)
    # w2_ref: [Dp, Dp]  bf16, stored as [in, out] = W2^T, zero-padded
    # o_ref:  [TM, d_true]
    x = jnp.minimum(x_ref[...], jnp.float32(max_value))   # torch.clamp(x, max=max_value)

    w1 = p_ref[0:1, :]
    b1 = p_ref[1:2, :]
    b2 = p_ref[2:3, :]
    gamma = p_ref[3:4, :]
    beta = p_ref[4:5, :]

    # linear1: Linear(1, d_model) + ReLU.  Padded lanes (w1=b1=0) stay exactly 0.
    h = jnp.maximum(x * w1 + b1, 0.0)                      # [TM, Dp] f32

    # linear2 on the MXU: bf16 inputs, f32 accumulation.  Padded rows/cols of w2
    # and padded b2 are 0, so padded output lanes of y are exactly 0.
    y = jnp.dot(h.astype(jnp.bfloat16), w2_ref[...],
                preferred_element_type=jnp.float32) + b2   # [TM, Dp] f32

    # LayerNorm over the true d_model lanes.  Two-pass variance (mean, then
    # E[(y-mean)^2]) for numerical robustness; padded lanes are masked out of
    # the centered sum so they don't contribute mean^2 each.
    inv_d = jnp.float32(1.0 / d_true)
    mean = jnp.sum(y, axis=-1, keepdims=True) * inv_d      # pad lanes of y are 0
    yc = y - mean
    if d_pad != d_true:
        lane = lax.broadcasted_iota(jnp.int32, yc.shape, 1)
        yc = jnp.where(lane < d_true, yc, 0.0)
    var = jnp.sum(yc * yc, axis=-1, keepdims=True) * inv_d
    out = yc * lax.rsqrt(var + jnp.float32(eps)) * gamma + beta

    # Dropout: eval-mode identity.
    # TODO(synk): training-mode dropout (p=0.1) with pltpu PRNG not reproduced;
    #             PyTorch's dropout RNG stream cannot be matched bit-exactly.
    o_ref[...] = out[:, :d_true].astype(o_ref.dtype)


def _vmem_budget():
    """Generation-aware VMEM budget: ~96 MiB on v5e/v6e (128 MiB), ~48 MiB on v7x (64 MiB)."""
    cap = 64 * 1024 * 1024                       # conservative fallback
    try:
        cap = int(getattr(pltpu.get_tpu_info(), "vmem_capacity_bytes", cap))
    except Exception:
        pass
    return min(cap * 3 // 4, 112 * 1024 * 1024)


def _choose_tm(n_tokens, d_pad, out_bytes, tm_req, vmem_budget):
    """Largest token tile (multiple of 8, <= n_tokens when possible) whose full
    VMEM footprint fits the budget."""
    cap = max(8, (n_tokens // 8) * 8) if n_tokens >= 8 else 8
    tm = max(8, min(_round_up(max(tm_req, 8), 8), cap))
    # Grid-invariant buffers (double-buffered by the pipeline):
    #   w2 bf16 (Dp, Dp) + packed (8, Dp) f32.
    fixed = 2 * (d_pad * d_pad * 2) + 2 * (8 * d_pad * 4)
    # Per-token-row bytes:
    #   x tile (tm, 1) lane-pads to (tm, 128) f32, double-buffered;
    #   out tile (tm, d) lane-padded to (tm, Dp), double-buffered;
    #   in-kernel temporaries (h f32 + h bf16 + y/yc f32 + out f32) ~ 3.5*Dp*4.
    per_row = 2 * 128 * 4 + 2 * d_pad * out_bytes + int(3.5 * d_pad * 4)
    avail = vmem_budget - fixed - (2 << 20)      # slack for compiler scratch
    while tm > 8 and tm * per_row > avail:
        tm = max(8, ((tm // 2) + 7) // 8 * 8)
    return tm


def prepare_params(params):
    """Pack/pad the parameter tensors once (outside the per-batch call path)."""
    d_model = int(params["w2"].shape[0])
    d_pad = _round_up(d_model, 128)

    def pad_vec(v):
        v = jnp.asarray(v, jnp.float32).reshape(-1)
        return jnp.pad(v, (0, d_pad - d_model))

    zeros = jnp.zeros((d_pad,), jnp.float32)
    packed = jnp.stack([pad_vec(params["w1"]), pad_vec(params["b1"]),
                        pad_vec(params["b2"]), pad_vec(params["gamma"]),
                        pad_vec(params["beta"]), zeros, zeros, zeros], axis=0)

    # w2 stored as [in, out] = W2^T, zero-padded, bf16 for the MXU.
    w2 = jnp.pad(jnp.asarray(params["w2"], jnp.float32),
                 ((0, d_pad - d_model), (0, d_pad - d_model))).astype(jnp.bfloat16)
    return {"packed": packed, "w2": w2, "d_model": d_model, "d_pad": d_pad}


def continuous_value_encoder(x, prepared, *, max_value=512, eps=1e-5, tm=1024,
                             out_dtype=jnp.bfloat16):
    """x: [B, S] -> [B, S, d_model].

    The kernel is HBM-writeback bound, so the default output dtype is bfloat16
    (halves the dominant store term).  Pass out_dtype=jnp.float32 for the
    closest match to the PyTorch module's f32 output.
    """
    B, S = x.shape
    d_model, d_pad = prepared["d_model"], prepared["d_pad"]
    out_bytes = jnp.dtype(out_dtype).itemsize

    N = B * S
    vmem_budget = _vmem_budget()
    tm = _choose_tm(N, d_pad, out_bytes, tm, vmem_budget)
    grid = (pl.cdiv(N, tm),)                 # ragged last block handled by Pallas

    x_col = x.reshape(N, 1).astype(jnp.float32)

    kernel = functools.partial(_cve_kernel, max_value=max_value, eps=eps,
                               d_true=d_model, d_pad=d_pad)

    flops = 2 * N * d_pad * d_pad + 14 * N * d_pad
    bytes_accessed = (N * 4 + 8 * d_pad * 4 + d_pad * d_pad * 2
                      + N * d_model * out_bytes)

    bcast = lambda i: (0, 0)
    out = pl.pallas_call(
        kernel,
        out_shape=jax.ShapeDtypeStruct((N, d_model), out_dtype),
        grid_spec=pltpu.PrefetchScalarGridSpec(
            num_scalar_prefetch=0,
            grid=grid,
            in_specs=[
                pl.BlockSpec((tm, 1), lambda i: (i, 0)),     # token values
                pl.BlockSpec((8, d_pad), bcast),             # packed param slab
                pl.BlockSpec((d_pad, d_pad), bcast),         # w2 (bf16, [in,out])
            ],
            out_specs=pl.BlockSpec((tm, d_model), lambda i: (i, 0)),
        ),
        compiler_params=pltpu.CompilerParams(
            dimension_semantics=("parallel",),
            vmem_limit_bytes=vmem_budget),
        cost_estimate=pl.CostEstimate(
            flops=flops, transcendentals=N, bytes_accessed=bytes_accessed),
    )(x_col, prepared["packed"], prepared["w2"])

    return out.reshape(B, S, d_model)


def init_params(key, d_model):
    """Deterministic synthetic parameters matching nn.Linear / nn.LayerNorm shapes."""
    k1, k2, k3, k4 = jax.random.split(key, 4)
    # nn.Linear(1, d_model): weight [d_model, 1], bias [d_model]
    w1 = jax.random.normal(k1, (d_model, 1), jnp.float32) * 0.5
    b1 = jax.random.normal(k2, (d_model,), jnp.float32) * 0.1
    # nn.Linear(d_model, d_model): weight [out, in]; store transpose [in, out]
    # so the kernel computes h @ W2^T + b2 as h @ w2 + b2.
    w2_torch = jax.random.normal(k3, (d_model, d_model), jnp.float32) * (1.0 / d_model ** 0.5)
    b2 = jax.random.normal(k4, (d_model,), jnp.float32) * 0.1
    gamma = jnp.ones((d_model,), jnp.float32)
    beta = jnp.zeros((d_model,), jnp.float32)
    return {
        "w1": jnp.transpose(w1),        # [1, D]
        "b1": b1,
        "w2": jnp.transpose(w2_torch),  # [in, out] = W2^T
        "b2": b2,
        "gamma": gamma,
        "beta": beta,
    }


def _reference(x, params, max_value=512, eps=1e-5, mimic_bf16=True):
    """Pure-JAX reference of the PyTorch forward (eval mode)."""
    xc = jnp.minimum(x[..., None].astype(jnp.float32), jnp.float32(max_value))
    h = jnp.maximum(xc * params["w1"].reshape(1, 1, -1) + params["b1"], 0.0)
    w2 = params["w2"].astype(jnp.float32)
    if mimic_bf16:
        h = h.astype(jnp.bfloat16)
        w2 = w2.astype(jnp.bfloat16)
    y = jnp.einsum("bsd,de->bse", h, w2,
                   preferred_element_type=jnp.float32) + params["b2"]
    mean = jnp.mean(y, axis=-1, keepdims=True)
    var = jnp.mean((y - mean) ** 2, axis=-1, keepdims=True)
    return (y - mean) * lax.rsqrt(var + eps) * params["gamma"] + params["beta"]


if __name__ == "__main__":
    MAX_VALUE = 512
    key = jax.random.PRNGKey(0)
    kx1, kx2, kx3, kp1, kp2 = jax.random.split(key, 5)

    # --- Test 1: small d_model (32), f32 output, tight tolerance. ---
    B, S, D_MODEL = 2, 8, 32
    x1 = jax.random.uniform(kx1, (B, S), jnp.float32, minval=0.0, maxval=1000.0)
    params1 = init_params(kp1, D_MODEL)
    prep1 = prepare_params(params1)
    out1 = jax.block_until_ready(
        continuous_value_encoder(x1, prep1, max_value=MAX_VALUE,
                                 out_dtype=jnp.float32))
    ref1 = _reference(x1, params1, max_value=MAX_VALUE)
    assert out1.shape == (B, S, D_MODEL), out1.shape
    assert jnp.allclose(out1, ref1, atol=5e-3, rtol=5e-3), \
        float(jnp.max(jnp.abs(out1 - ref1)))

    # --- Test 2: ragged token count (not a multiple of tm), default bf16 out. ---
    x2 = jax.random.uniform(kx2, (3, 50), jnp.float32, minval=0.0, maxval=1000.0)
    out2 = jax.block_until_ready(
        continuous_value_encoder(x2, prep1, max_value=MAX_VALUE, tm=64))
    ref2 = _reference(x2, params1, max_value=MAX_VALUE)
    assert out2.shape == (3, 50, D_MODEL), out2.shape
    assert out2.dtype == jnp.bfloat16, out2.dtype
    err2 = out2.astype(jnp.float32) - ref2
    assert jnp.allclose(out2.astype(jnp.float32), ref2, atol=3e-2, rtol=3e-2), \
        float(jnp.max(jnp.abs(err2)))

    # --- Test 3: lane-aligned d_model (256, no d padding), ragged N, bf16 out. ---
    D3 = 256
    x3 = jax.random.uniform(kx3, (2, 13), jnp.float32, minval=0.0, maxval=1000.0)
    params3 = init_params(kp2, D3)
    prep3 = prepare_params(params3)
    out3 = jax.block_until_ready(
        continuous_value_encoder(x3, prep3, max_value=MAX_VALUE))
    ref3 = _reference(x3, params3, max_value=MAX_VALUE)
    assert out3.shape == (2, 13, D3), out3.shape
    err3 = out3.astype(jnp.float32) - ref3
    assert jnp.allclose(out3.astype(jnp.float32), ref3, atol=3e-2, rtol=3e-2), \
        float(jnp.max(jnp.abs(err3)))

    print("KERNEL_OK")
</pallas_src>

<mosaic_0001>
module attributes {stable_mosaic.version = 11 : i64} {
  func.func @_cve_kernel(%arg0: i32, %arg1: memref<16x1xf32, #tpu.memory_space<vmem>>, %arg2: memref<8x128xf32, #tpu.memory_space<vmem>>, %arg3: memref<128x128xbf16, #tpu.memory_space<vmem>>, %arg4: memref<16x32xf32, #tpu.memory_space<vmem>>) attributes {dimension_semantics = [#tpu.dimension_semantics<parallel>], iteration_bounds = array<i64: 1>, scalar_prefetch = 0 : i64, scratch_operands = 0 : i64, tpu.core_type = #tpu.core_type<tc>, window_params = [{transform_indices = @transform_0, window_bounds = array<i64: 16, 1>}, {pipeline_mode = #tpu.pipeline_mode<synchronous>, transform_indices = @transform_1, window_bounds = array<i64: 8, 128>}, {pipeline_mode = #tpu.pipeline_mode<synchronous>, transform_indices = @transform_2, window_bounds = array<i64: 128, 128>}, {transform_indices = @transform_3, window_bounds = array<i64: 16, 32>}]} {
    %c0 = arith.constant 0 : index
    %c0_0 = arith.constant 0 : index
    %0 = vector.load %arg1[%c0, %c0_0] : memref<16x1xf32, #tpu.memory_space<vmem>>, vector<16x1xf32>
    %cst = arith.constant 5.120000e+02 : f32
    %1 = vector.broadcast %cst : f32 to vector<16x1xf32>
    %2 = arith.minimumf %0, %1 : vector<16x1xf32>
    %c0_1 = arith.constant 0 : index
    %c0_2 = arith.constant 0 : index
    %3 = vector.load %arg2[%c0_1, %c0_2] : memref<8x128xf32, #tpu.memory_space<vmem>>, vector<1x128xf32>
    %c1 = arith.constant 1 : index
    %c0_3 = arith.constant 0 : index
    %4 = vector.load %arg2[%c1, %c0_3] : memref<8x128xf32, #tpu.memory_space<vmem>>, vector<1x128xf32>
    %c2 = arith.constant 2 : index
    %c0_4 = arith.constant 0 : index
    %5 = vector.load %arg2[%c2, %c0_4] : memref<8x128xf32, #tpu.memory_space<vmem>>, vector<1x128xf32>
    %c3 = arith.constant 3 : index
    %c0_5 = arith.constant 0 : index
    %6 = vector.load %arg2[%c3, %c0_5] : memref<8x128xf32, #tpu.memory_space<vmem>>, vector<1x128xf32>
    %c4 = arith.constant 4 : index
    %c0_6 = arith.constant 0 : index
    %7 = vector.load %arg2[%c4, %c0_6] : memref<8x128xf32, #tpu.memory_space<vmem>>, vector<1x128xf32>
    %8 = vector.broadcast %2 : vector<16x1xf32> to vector<16x128xf32>
    %9 = vector.broadcast %3 : vector<1x128xf32> to vector<16x128xf32>
    %10 = arith.mulf %8, %9 : vector<16x128xf32>
    %11 = vector.broadcast %4 : vector<1x128xf32> to vector<16x128xf32>
    %12 = arith.addf %10, %11 : vector<16x128xf32>
    %cst_7 = arith.constant 0.000000e+00 : f32
    %13 = vector.broadcast %cst_7 : f32 to vector<16x128xf32>
    %14 = arith.maximumf %12, %13 : vector<16x128xf32>
    %15 = arith.truncf %14 : vector<16x128xf32> to vector<16x128xbf16>
    %c0_8 = arith.constant 0 : index
    %c0_9 = arith.constant 0 : index
    %16 = vector.load %arg3[%c0_8, %c0_9] : memref<128x128xbf16, #tpu.memory_space<vmem>>, vector<128x128xbf16>
    %cst_10 = arith.constant dense<0.000000e+00> : vector<16x128xf32>
    %17 = tpu.matmul %15, %16, %cst_10 {dimension_numbers = #tpu.dot_dimension_numbers<[1], [0], [0], [1], [0, 0, 1, 1], [], []>} : vector<16x128xbf16>, vector<128x128xbf16>, vector<16x128xf32> -> vector<16x128xf32>
    %18 = vector.broadcast %5 : vector<1x128xf32> to vector<16x128xf32>
    %19 = arith.addf %17, %18 : vector<16x128xf32>
    %cst_11 = arith.constant dense<0.000000e+00> : vector<16xf32>
    %20 = vector.multi_reduction <add>, %19, %cst_11 [1] : vector<16x128xf32> to vector<16xf32>
    %21 = vector.shape_cast %20 : vector<16xf32> to vector<16x1xf32>
    %cst_12 = arith.constant 3.125000e-02 : f32
    %22 = vector.broadcast %cst_12 : f32 to vector<16x1xf32>
    %23 = arith.mulf %21, %22 : vector<16x1xf32>
    %24 = vector.broadcast %23 : vector<16x1xf32> to vector<16x128xf32>
    %25 = arith.subf %19, %24 : vector<16x128xf32>
    %26 = tpu.iota {dimensions = array<i32: 1>} : vector<16x128xi32>
    %c32_i32 = arith.constant 32 : i32
    %27 = vector.broadcast %c32_i32 : i32 to vector<16x128xi32>
    %28 = arith.cmpi slt, %26, %27 : vector<16x128xi32>
    %cst_13 = arith.constant 0.000000e+00 : f32
    %29 = vector.broadcast %cst_13 : f32 to vector<16x128xf32>
    %30 = arith.select %28, %25, %29 : vector<16x128xi1>, vector<16x128xf32>
    %31 = arith.mulf %30, %30 : vector<16x128xf32>
    %cst_14 = arith.constant dense<0.000000e+00> : vector<16xf32>
    %32 = vector.multi_reduction <add>, %31, %cst_14 [1] : vector<16x128xf32> to vector<16xf32>
    %33 = vector.shape_cast %32 : vector<16xf32> to vector<16x1xf32>
    %cst_15 = arith.constant 3.125000e-02 : f32
    %34 = vector.broadcast %cst_15 : f32 to vector<16x1xf32>
    %35 = arith.mulf %33, %34 : vector<16x1xf32>
    %cst_16 = arith.constant 9.99999974E-6 : f32
    %36 = vector.broadcast %cst_16 : f32 to vector<16x1xf32>
    %37 = arith.addf %35, %36 : vector<16x1xf32>
    %38 = math.rsqrt %37 : vector<16x1xf32>
    %39 = vector.broadcast %38 : vector<16x1xf32> to vector<16x128xf32>
    %40 = arith.mulf %30, %39 : vector<16x128xf32>
    %41 = vector.broadcast %6 : vector<1x128xf32> to vector<16x128xf32>
    %42 = arith.mulf %40, %41 : vector<16x128xf32>
    %43 = vector.broadcast %7 : vector<1x128xf32> to vector<16x128xf32>
    %44 = arith.addf %42, %43 : vector<16x128xf32>
    %45 = vector.extract_strided_slice %44 {offsets = [0, 0], sizes = [16, 32], strides = [1, 1]} : vector<16x128xf32> to vector<16x32xf32>
    %c0_17 = arith.constant 0 : index
    %c0_18 = arith.constant 0 : index
    %46 = vector.load %arg4[%c0_17, %c0_18] : memref<16x32xf32, #tpu.memory_space<vmem>>, vector<16x32xf32>
    tpu.vector_store %arg4[%c0_17, %c0_18], %45 {strides = array<i32>} : memref<16x32xf32, #tpu.memory_space<vmem>>, vector<16x32xf32>,
    return
  }
  func.func @transform_0(%arg0: i32) -> (i32, i32) {
    %c0_i32 = arith.constant 0 : i32
    %c0_i32_0 = arith.constant 0 : i32
    return %arg0, %c0_i32 : i32, i32
  }
  func.func @transform_1(%arg0: i32) -> (i32, i32) {
    %c0_i32 = arith.constant 0 : i32
    %c0_i32_0 = arith.constant 0 : i32
    %c0_i32_1 = arith.constant 0 : i32
    return %c0_i32, %c0_i32_0 : i32, i32
  }
  func.func @transform_2(%arg0: i32) -> (i32, i32) {
    %c0_i32 = arith.constant 0 : i32
    %c0_i32_0 = arith.constant 0 : i32
    %c0_i32_1 = arith.constant 0 : i32
    return %c0_i32, %c0_i32_0 : i32, i32
  }
  func.func @transform_3(%arg0: i32) -> (i32, i32) {
    %c0_i32 = arith.constant 0 : i32
    %c0_i32_0 = arith.constant 0 : i32
    return %arg0, %c0_i32 : i32, i32
  }
}

</mosaic_0001>

<llo_original>
// kernel: tpu_custom_call.1
$region0: #{tpu_custom_call.1}
  #allocation0 [shape = 'u32[]', space=smem, size = 0x4, offset = 0x4, fixed_abs, tag = 'smem constant byte address 0x4 - core index']
  #allocation1 [shape = 'u32[144,128]{1,0:T(1,128)}', space=vmem, size = 0x12000, scoped, tag = 'internal scratch']
  %s0 = inlined_call_operand.vmem [shape: f32[16,1], index: 0, kind: input, shape index: {}]
  %s1 = inlined_call_operand.vmem [shape: f32[8,128], index: 1, kind: input, shape index: {}]
  %s2 = inlined_call_operand.hbm [shape: bf16[128,128], index: 2, kind: input, shape index: {}]
  %s3 = inlined_call_operand.hbm [shape: f32[16,32], index: 3, kind: output, shape index: {}]
  %s4 = sld [smem:[#allocation0]]
  $region26: #{tpu_custom_call.1} parent=0
    _
  %s6 = ssub.s32 1, %s4
  %s7 = scalar_select 0, %s6, %s4
  $region1: #{tpu_custom_call.1} parent=0
    #allocation2 [shape = 'u8[32768]{0}', space=vmem, size = 0x8000, scoped, tag = 'input window, operand 2, single buffered']
    #allocation3 [shape = 's32[1]{0}', space=sflag, size = 0x4, scoped, tag = 'scoped memory for tpu_custom_call.1']
    #allocation4 [shape = 's32[1]{0}', space=sflag, size = 0x4, scoped, tag = 'scoped memory for tpu_custom_call.1']
    #allocation5 [shape = 'u8[8192]{0}', space=vmem, size = 0x2000, scoped, tag = 'output window, operand 0, single buffered']
    %8 = vsyncpa [#allocation3], 0
    %9 = vsyncpa [#allocation4], 0
    // Predicated region
    $region2: #{tpu_custom_call.1} parent=1 // pred_check
      _
    $region3: #{tpu_custom_call.1} parent=1 // pred_check_branch
      %11 = sbr.rel (0) target = $region5
    $region4: #{tpu_custom_call.1} parent=1 // pred_region
      _
    $region5: #{tpu_custom_call.1} parent=1 // pred_fallthru
      _
    // Predicated region
    $region6: #{tpu_custom_call.1} parent=1 // pred_check
      _
    $region7: #{tpu_custom_call.1} parent=1 // pred_check_branch
      %13 = sbr.rel (0) target = $region9
    $region8: #{tpu_custom_call.1} parent=1 // pred_region
      _
    $region9: #{tpu_custom_call.1} parent=1 // pred_fallthru
      _
    // Predicated region
    $region10: #{tpu_custom_call.1} parent=1 // pred_check
      _
    $region11: #{tpu_custom_call.1} parent=1 // pred_check_branch
      %15 = sbr.rel (0) target = $region13
    $region12: #{tpu_custom_call.1} parent=1 // pred_region
      %s17 = ssub.s32 1024, 1024
      %18 = vsyncadd [#allocation3], %s17
      %s19 = sshll.u32 [#allocation2], 4
      %s20 = int_to_ptr.vmem [resolvable:$true] %s19
      %25 = dma.hbm_to_vmem [thread:$0]  %s2, 1024, %s20, [#allocation3], 64, 64, 4
    $region13: #{tpu_custom_call.1} parent=1 // pred_fallthru
      _
    // Predicated region
    $region14: #{tpu_custom_call.1} parent=1 // pred_check
      _
    $region15: #{tpu_custom_call.1} parent=1 // pred_check_branch
      %27 = sbr.rel (0) target = $region17
    $region16: #{tpu_custom_call.1} parent=1 // pred_region
      %28 = dma.done [#allocation3], 1024
    $region17: #{tpu_custom_call.1} parent=1 // pred_fallthru
      _
    %v30 = vld [vmem:[%s0] sm:$0xff]
    %v31 = vld [vmem:[%s0 + $0x8] sm:$0xff]
    %v32 = vmin.f32 %v30, 512.0
    %v33 = vmin.f32 %v31, 512.0
    %v34 = vld [vmem:[%s1] sm:$0x1]
    %v35 = vld [vmem:[%s1 + $0x1] sm:$0x1]
    %v36 = vld [vmem:[%s1 + $0x2] sm:$0x1]
    %v37 = vld [vmem:[%s1 + $0x3] sm:$0x1]
    %v38 = vld [vmem:[%s1 + $0x4] sm:$0x1]
    %40 = vset.pattern.permute.xlu0 0
    %41 = vperm.xlu0 %40, %v32
    %v42 = vpop.permute.xlu0 %41
    %45 = vset.pattern.permute.xlu0 0
    %46 = vperm.xlu0 %45, %v33
    %v47 = vpop.permute.xlu0 %46
    %v49 = vlaneseq
    %v50 = vshrl.u32 %v49, 7
    %v51 = vsub.s32 0, %v50
    %v52 = vrot.slane %v34, %v51
    %v53 = vmul.f32 %v42, %v52
    %v54 = vmul.f32 %v47, %v52
    %v55 = vlaneseq
    %v56 = vshrl.u32 %v55, 7
    %v57 = vsub.s32 0, %v56
    %v58 = vrot.slane %v35, %v57
    %v59 = vadd.f32 %v53, %v58
    %v60 = vadd.f32 %v54, %v58
    %v61 = vmax.f32 %v59, 0.0
    %v62 = vmax.f32 %v60, 0.0
    %v63 = vpack.c.bf16 %v62, %v61
    %v64 = vld [vmem:[#allocation2] sm:$0xf]
    %v65 = vld [vmem:[#allocation2 + $0x4] sm:$0xf]
    %v66 = vld [vmem:[#allocation2 + $0x8] sm:$0xf]
    %v67 = vld [vmem:[#allocation2 + $0xc] sm:$0xf]
    %v68 = vld [vmem:[#allocation2 + $0x10] sm:$0xf]
    %v69 = vld [vmem:[#allocation2 + $0x14] sm:$0xf]
    %v70 = vld [vmem:[#allocation2 + $0x18] sm:$0xf]
    %v71 = vld [vmem:[#allocation2 + $0x1c] sm:$0xf]
    %v72 = vld [vmem:[#allocation2 + $0x20] sm:$0xf]
    %v73 = vld [vmem:[#allocation2 + $0x24] sm:$0xf]
    %v74 = vld [vmem:[#allocation2 + $0x28] sm:$0xf]
    %v75 = vld [vmem:[#allocation2 + $0x2c] sm:$0xf]
    %v76 = vld [vmem:[#allocation2 + $0x30] sm:$0xf]
    %v77 = vld [vmem:[#allocation2 + $0x34] sm:$0xf]
    %v78 = vld [vmem:[#allocation2 + $0x38] sm:$0xf]
    %v79 = vld [vmem:[#allocation2 + $0x3c] sm:$0xf]
    %v80 = vlaneseq
    %v81 = vshrl.u32 %v80, 7
    %v82 = vsub.s32 0, %v81
    %v83 = vrot.slane %v36, %v82
    %v100 = vunpack.c.l.b16 %v64
    %v101 = vunpack.c.l.b16 %v65
    %v102 = vunpack.c.l.b16 %v66
    %v103 = vunpack.c.l.b16 %v67
    %v104 = vunpack.c.l.b16 %v68
    %v105 = vunpack.c.l.b16 %v69
    %v106 = vunpack.c.l.b16 %v70
    %v107 = vunpack.c.l.b16 %v71
    %v108 = vunpack.c.l.b16 %v72
    %v109 = vunpack.c.l.b16 %v73
    %v110 = vunpack.c.l.b16 %v74
    %v111 = vunpack.c.l.b16 %v75
    %v112 = vunpack.c.l.b16 %v76
    %v113 = vunpack.c.l.b16 %v77
    %v114 = vunpack.c.l.b16 %v78
    %v115 = vunpack.c.l.b16 %v79
    %v116 = vpack.c.b16 %v101, %v100
    %v117 = vpack.c.b16 %v103, %v102
    %v118 = vpack.c.b16 %v105, %v104
    %v119 = vpack.c.b16 %v107, %v106
    %v120 = vpack.c.b16 %v109, %v108
    %v121 = vpack.c.b16 %v111, %v110
    %v122 = vpack.c.b16 %v113, %v112
    %v123 = vpack.c.b16 %v115, %v114
    %132 = vmatprep.subr.bf16.mxu0 0
    %133 = vmatpush1.bf16.msra.mxu0 %v116
    %134 = vmatprep.subr.bf16.mxu0 0
    %135 = vmatpush1.bf16.msra.mxu0 %v117
    %136 = vmatprep.subr.bf16.mxu0 0
    %137 = vmatpush1.bf16.msra.mxu0 %v118
    %138 = vmatprep.subr.bf16.mxu0 0
    %139 = vmatpush1.bf16.msra.mxu0 %v119
    %140 = vmatprep.subr.bf16.mxu0 0
    %141 = vmatpush1.bf16.msra.mxu0 %v120
    %142 = vmatprep.subr.bf16.mxu0 0
    %143 = vmatpush1.bf16.msra.mxu0 %v121
    %144 = vmatprep.subr.bf16.mxu0 0
    %145 = vmatpush1.bf16.msra.mxu0 %v122
    %146 = vmatprep.subr.bf16.mxu0 0
    %147 = vmatpush1.bf16.msra.mxu0 %v123
    %148 = vmatprep.subr.bf16.mxu0 0
    %149 = vmatpush1.bf16.msra.mxu0 0
    %150 = vmatprep.subr.bf16.mxu0 0
    %151 = vmatpush1.bf16.msra.mxu0 0
    %152 = vmatprep.subr.bf16.mxu0 0
    %153 = vmatpush1.bf16.msra.mxu0 0
    %154 = vmatprep.subr.bf16.mxu0 0
    %155 = vmatpush1.bf16.msra.mxu0 0
    %156 = vmatprep.subr.bf16.mxu0 0
    %157 = vmatpush1.bf16.msra.mxu0 0
    %158 = vmatprep.subr.bf16.mxu0 0
    %159 = vmatpush1.bf16.msra.mxu0 0
    %160 = vmatprep.subr.bf16.mxu0 0
    %161 = vmatpush1.bf16.msra.mxu0 0
    %162 = vmatprep.subr.bf16.mxu0 0
    %163 = vmatpush1.bf16.msra.mxu0 0
    %164 = vmatprep.mubr.bf16.mxu0 0
    %165 = vmatmul.mubr.bf16.gmra.mrb[0].mxu0 %v63
    %v166 = vpop.f32.mrb[0].mxu0
    %v167 = vadd.f32 %v83, %v166
    %v168 = vpop.f32.mrb[0].mxu0
    %v169 = vpop.f32.mrb[0].mxu0
    %v170 = vadd.f32 %v83, %v169
    %v171 = vpop.f32.mrb[0].mxu0
    %172 = vdwg.mxu0
    %173 = vadd.xlane.f32.xlu0 %v167
    %v174 = vpop.xlane.xlu0 %173
    %175 = vadd.xlane.f32.xlu0 %v170
    %v176 = vpop.xlane.xlu0 %175
    %v177 = vmul.f32 %v174, 0.03125
    %v178 = vmul.f32 %v176, 0.03125
    %v179 = vsub.f32 %v167, %v177
    %v180 = vsub.f32 %v170, %v178
    %v181 = vlaneseq
    %v182 = vand.u32 %v181, 127
    %vm183 = vcmp.lt.s32.totalorder %v182, 32
    %v184 = vsel %vm183, %v179, 0.0
    %v185 = vsel %vm183, %v180, 0.0
    %v186 = vmul.f32 %v184, %v184
    %v187 = vmul.f32 %v185, %v185
    %188 = vadd.xlane.f32.xlu0 %v186
    %v189 = vpop.xlane.xlu0 %188
    %190 = vadd.xlane.f32.xlu0 %v187
    %v191 = vpop.xlane.xlu0 %190
    %v192 = vmul.f32 %v189, 0.03125
    %v193 = vmul.f32 %v191, 0.03125
    %v194 = vadd.f32 %v192, 1e-05
    %v195 = vadd.f32 %v193, 1e-05
    %v196 = vrsqrt.pop %v194
    %v197 = vrsqrt.pop %v195
    %v198 = vmul.f32 %v184, %v196
    %v199 = vmul.f32 %v185, %v197
    %v200 = vlaneseq
    %v201 = vshrl.u32 %v200, 7
    %v202 = vsub.s32 0, %v201
    %v203 = vrot.slane %v37, %v202
    %v204 = vmul.f32 %v198, %v203
    %v205 = vmul.f32 %v199, %v203
    %v206 = vlaneseq
    %v207 = vshrl.u32 %v206, 7
    %v208 = vsub.s32 0, %v207
    %v209 = vrot.slane %v38, %v208
    %v210 = vadd.f32 %v204, %v209
    %v211 = vadd.f32 %v205, %v209
    %vm212 = vcmask 261120
    %213 = vst.msk [vmem:[#allocation5] sm:$0xff] %vm212, %v210
    %214 = vst.msk [vmem:[#allocation5 + $0x8] sm:$0xff] %vm212, %v211
    // Predicated region
    $region18: #{tpu_custom_call.1} parent=1 // pred_check
      _
    $region19: #{tpu_custom_call.1} parent=1 // pred_check_branch
      %216 = sbr.rel (0) target = $region21
    $region20: #{tpu_custom_call.1} parent=1 // pred_region
      %s218 = ssub.s32 256, 256
      %219 = vsyncadd [#allocation4], %s218
      %s220 = sshll.u32 [#allocation5], 4
      %s221 = int_to_ptr.vmem [resolvable:$true] %s220
      %226 = dma.vmem_to_hbm [thread:$0]  %s221, 256, %s3, [#allocation4], 128, 128, 8
    $region21: #{tpu_custom_call.1} parent=1 // pred_fallthru
      _
    // Predicated region
    $region22: #{tpu_custom_call.1} parent=1 // pred_check
      _
    $region23: #{tpu_custom_call.1} parent=1 // pred_check_branch
      %228 = sbr.rel (0) target = $region25
    $region24: #{tpu_custom_call.1} parent=1 // pred_region
      %229 = dma.done [#allocation4], 256
    $region25: #{tpu_custom_call.1} parent=1 // pred_fallthru
      _
    %230 = vsyncpa [#allocation3], 1
    %231 = vsyncpa [#allocation4], 1

</llo_original>
